<compile_context>
chip_gen: v6e
topology: v6e:2x2x1
jax: 0.10.0
libtpu: 0.0.40
codegen_flags: <defaults>
</compile_context>

<pallas_src>
import math
import functools

import jax
import jax.numpy as jnp
from jax.experimental import pallas as pl
from jax.experimental.pallas import tpu as pltpu


def _round_up(v, m):
    return ((v + m - 1) // m) * m


def _noise_layout(d, h, cpad):
    """Row offsets of the four noise blocks inside one merged (rows, cols) draw.

    Sublane-aligned (multiples of 8) so the in-kernel static slices are cheap.
    At the demo sizes (D=32, H=128, CPAD=128) this is the (176, 128) layout
    suggested in the perf review.
    """
    o_w1 = 0                        # (d, h)    body.weight noise
    o_b1 = _round_up(d, 8)          # (1, h)    body.bias   noise
    o_w2 = o_b1 + 8                 # (h, cpad) head.weight noise
    o_b2 = o_w2 + _round_up(h, 8)   # (1, cpad) head.bias   noise
    rows = o_b2 + 8
    cols = max(h, cpad)
    return o_w1, o_b1, o_w2, o_b2, rows, cols


# ----------------------------------------------------------------------------
# Fused kernel: forward + CE loss + backward + SGLD grad adjustment
# ----------------------------------------------------------------------------
def _sgld_step_kernel(scal_ref, y_ref, x_ref, noise_ref,
                      w1_ref, b1_ref, w2_ref, b2_ref,
                      w10_ref, b10_ref, w20_ref, b20_ref,
                      loss_ref, logits_ref, gw1_ref, gb1_ref, gw2_ref, gb2_ref,
                      *, num_classes, noise_offsets):
    f32 = jnp.float32
    B, CPAD = logits_ref.shape
    D, H = w1_ref.shape

    x = x_ref[...]
    w1 = w1_ref[...]
    b1 = b1_ref[...]
    w2 = w2_ref[...]
    b2 = b2_ref[...]

    # ---------------- forward: logits = relu(x @ w1 + b1) @ w2 + b2 ----------
    # (bf16 operand casts would pay off on v6e/v7x once D/H/B grow; at demo
    # sizes the launch / RNG overheads dominate, so keep f32.)
    h_pre = jnp.dot(x, w1, preferred_element_type=f32) + b1
    h = jnp.maximum(h_pre, 0.0)
    logits = jnp.dot(h, w2, preferred_element_type=f32) + b2
    logits_ref[...] = logits                                  # lane-dense store

    # ---------------- cross-entropy loss (mean over batch) -------------------
    # head.bias pad columns hold -1e30 (head.weight pads are 0), so padded
    # logits are already -1e30: no explicit class-valid mask is needed here.
    class_ids = jax.lax.broadcasted_iota(jnp.int32, (B, CPAD), 1)
    onehot = (class_ids == y_ref[...]).astype(f32)            # y_ref: (B, 1) int32

    m = jnp.max(logits, axis=-1, keepdims=True)
    e = jnp.exp(logits - m)                                   # pad cols -> exactly 0
    z = jnp.sum(e, axis=-1, keepdims=True)
    probs = e / z
    log_z = m + jnp.log(z)
    picked = jnp.sum(onehot * logits, axis=-1, keepdims=True)
    inv_b = 1.0 / B
    loss = jnp.sum(log_z - picked) * inv_b
    loss_ref[...] = jnp.full((1, 1), loss, dtype=f32)

    # ---------------- analytic backward (replaces loss.backward()) -----------
    dlogits = (probs - onehot) * inv_b                        # (B, CPAD)
    gw2 = jax.lax.dot_general(h, dlogits, (((0,), (0,)), ((), ())),
                              preferred_element_type=f32)     # (H, CPAD)
    gb2 = jnp.sum(dlogits, axis=0, keepdims=True)             # (1, CPAD)
    dh = jax.lax.dot_general(dlogits, w2, (((1,), (1,)), ((), ())),
                             preferred_element_type=f32)      # (B, H)
    dh_pre = jnp.where(h_pre > 0.0, dh, 0.0)
    gw1 = jax.lax.dot_general(x, dh_pre, (((0,), (0,)), ((), ())),
                              preferred_element_type=f32)     # (D, H)
    gb1 = jnp.sum(dh_pre, axis=0, keepdims=True)              # (1, H)

    # ---------------- SGLD gradient adjustment -------------------------------
    inv_prior_n = scal_ref[0]      # 1 / (prior_sig^2 * N)
    ns_body = scal_ref[1]          # nd * sqrt(2 / (N * lr_body))
    ns_head = scal_ref[2]          # nd * sqrt(2 / (N * lr_head))
    bias_prior = scal_ref[3]       # 1.0 informative / 0.0 uninformative

    o_w1, o_b1, o_w2, o_b2 = noise_offsets
    noise = noise_ref[...]                                    # one merged draw
    n_w1 = noise[o_w1:o_w1 + D, :H]
    n_b1 = noise[o_b1:o_b1 + 1, :H]
    n_w2 = noise[o_w2:o_w2 + H, :CPAD]
    n_b2 = noise[o_b2:o_b2 + 1, :CPAD]

    gw1_ref[...] = gw1 + inv_prior_n * (w1 - w10_ref[...]) + ns_body * n_w1
    gb1_ref[...] = (gb1 + (bias_prior * inv_prior_n) * (b1 - b10_ref[...])
                    + ns_body * n_b1)

    # keep padded (unused) classifier columns exactly zero so the baked-in
    # -1e30 head.bias pads (and zero head.weight pads) never drift
    head_w_valid = jax.lax.broadcasted_iota(jnp.int32, (H, CPAD), 1) < num_classes
    head_b_valid = jax.lax.broadcasted_iota(jnp.int32, (1, CPAD), 1) < num_classes
    gw2_ref[...] = jnp.where(
        head_w_valid,
        gw2 + inv_prior_n * (w2 - w20_ref[...]) + ns_head * n_w2,
        0.0)
    gb2_ref[...] = jnp.where(
        head_b_valid,
        gb2 + (bias_prior * inv_prior_n) * (b2 - b20_ref[...]) + ns_head * n_b2,
        0.0)


def _sgld_fused_call(scal, y2d, x, noise, w1, b1, w2, b2, w10, b10, w20, b20,
                     *, num_classes):
    B, D = x.shape
    H = w1.shape[1]
    CPAD = w2.shape[1]
    o_w1, o_b1, o_w2, o_b2, _, _ = _noise_layout(D, H, CPAD)
    smem = pl.BlockSpec(memory_space=pltpu.MemorySpace.SMEM)
    vmem = pl.BlockSpec(memory_space=pltpu.MemorySpace.VMEM)
    out_shape = (
        jax.ShapeDtypeStruct((1, 1), jnp.float32),       # loss
        jax.ShapeDtypeStruct((B, CPAD), jnp.float32),    # logits (lane-dense)
        jax.ShapeDtypeStruct((D, H), jnp.float32),       # grad body.weight
        jax.ShapeDtypeStruct((1, H), jnp.float32),       # grad body.bias
        jax.ShapeDtypeStruct((H, CPAD), jnp.float32),    # grad head.weight
        jax.ShapeDtypeStruct((1, CPAD), jnp.float32),    # grad head.bias
    )
    # TODO(synk): if the optimizer step ever moves into this module, fuse the
    # parameter update here via input_output_aliases on w1/b1/w2/b2 to halve
    # per-step HBM traffic; the PyTorch spec only fills .grad, so we don't.
    return pl.pallas_call(
        functools.partial(_sgld_step_kernel, num_classes=num_classes,
                          noise_offsets=(o_w1, o_b1, o_w2, o_b2)),
        in_specs=[smem] + [vmem] * 11,
        out_specs=(vmem,) * 6,
        out_shape=out_shape,
    )(scal, y2d, x, noise, w1, b1, w2, b2, w10, b10, w20, b20)


@functools.partial(jax.jit, static_argnames=("num_classes",))
def _sgld_step(x, y, params, params0, scal, key, *, num_classes):
    w1 = params["body.weight"]
    w2 = params["head.weight"]
    D, H = w1.shape
    CPAD = w2.shape[1]
    # ONE merged, sublane-aligned Gaussian draw feeding all four noise terms.
    # TODO(synk): on real hardware this could use the in-kernel TPU PRNG
    # (pltpu.prng_seed / prng_random_bits), but that primitive has no
    # CPU/interpret lowering, so keep the portable single-draw path.
    _, _, _, _, rows, cols = _noise_layout(D, H, CPAD)
    noise = jax.random.normal(key, (rows, cols), jnp.float32)
    y2d = y.reshape(-1, 1).astype(jnp.int32)
    loss, logits, gw1, gb1, gw2, gb2 = _sgld_fused_call(
        scal, y2d, x, noise,
        w1, params["body.bias"], w2, params["head.bias"],
        params0["body.weight"], params0["body.bias"],
        params0["head.weight"], params0["head.bias"],
        num_classes=num_classes)
    grads = {"body.weight": gw1, "body.bias": gb1,
             "head.weight": gw2, "head.bias": gb2}
    return loss[0, 0], logits[:, :num_classes], grads


# ----------------------------------------------------------------------------
# Tiny workhorse net (2-layer MLP) with a lane-dense (128-padded) head
# ----------------------------------------------------------------------------
class MLPNet:
    readout_name = "head"

    def __init__(self, key, in_dim, hidden, num_classes, dtype=jnp.float32):
        cpad = ((num_classes + 127) // 128) * 128
        k1, k2, k3, k4 = jax.random.split(key, 4)
        w2 = 0.1 * jax.random.normal(k3, (hidden, num_classes), dtype)
        b2 = 0.1 * jax.random.normal(k4, (1, num_classes), dtype)
        self.params = {
            "body.weight": 0.1 * jax.random.normal(k1, (in_dim, hidden), dtype),
            "body.bias": 0.1 * jax.random.normal(k2, (1, hidden), dtype),
            # head.weight pads are 0; head.bias pads are -1e30 so the in-kernel
            # softmax needs no explicit class mask (pad grads are forced to
            # zero in the kernel, so these pad values never drift).
            "head.weight": jnp.pad(w2, ((0, 0), (0, cpad - num_classes))),
            "head.bias": jnp.pad(b2, ((0, 0), (0, cpad - num_classes)),
                                 constant_values=-1e30),
        }
        self.num_classes = num_classes
        self.grads = None   # filled by SGLDModel.forward (mirrors p.grad effect)


# ----------------------------------------------------------------------------
# SGLD "Model" — no parameters of its own, mirrors the PyTorch module
# ----------------------------------------------------------------------------
class SGLDModel:
    def __init__(self, ND, prior_sig=1.0, bias="informative"):
        self.ND = ND
        self.prior_sig = prior_sig
        self.bias = bias
        self._scal_cache = {}   # (lrs, Ninflate, nd) -> device scalar array

    def _get_scal(self, lrs, Ninflate, nd):
        ck = (tuple(float(l) for l in lrs), float(Ninflate), float(nd))
        scal = self._scal_cache.get(ck)
        if scal is None:
            N = float(self.ND) * float(Ninflate)
            lr_body = lrs[0]
            lr_head = lrs[0] if len(lrs) == 1 else lrs[1]
            scal = jnp.array(
                [1.0 / (self.prior_sig ** 2 * N),
                 nd * math.sqrt(2.0 / (N * lr_body)),
                 nd * math.sqrt(2.0 / (N * lr_head)),
                 0.0 if self.bias == "uninformative" else 1.0],
                dtype=jnp.float32)
            self._scal_cache[ck] = scal
        return scal

    def forward(self, x, y, net, net0, lrs, key, Ninflate=1.0, nd=1.0):
        # TODO(synk): the original takes an arbitrary `criterion`; here
        # cross-entropy (== NLLLoss on log-softmax outputs) is fused into the
        # kernel and loss.backward() is replaced by the analytic MLP backward.
        scal = self._get_scal(lrs, Ninflate, nd)
        loss, out, grads = _sgld_step(x, y, net.params, net0.params, scal, key,
                                      num_classes=net.num_classes)
        net.grads = grads        # "Effects: net has .grad fields filled"
        # loss stays a device scalar; caller pulls float(loss) when needed
        return loss, out


# ----------------------------------------------------------------------------
# Example run
# ----------------------------------------------------------------------------
if __name__ == "__main__":
    B, D, H, C = 8, 32, 128, 10

    root = jax.random.PRNGKey(0)
    kx, ky, knet, knet0, knoise = jax.random.split(root, 5)

    x = jax.random.normal(kx, (B, D), jnp.float32)
    y = jax.random.randint(ky, (B,), 0, C, jnp.int32)

    net = MLPNet(knet, D, H, C)       # workhorse net
    net0 = MLPNet(knet0, D, H, C)     # prior-mean net (net0)

    model = SGLDModel(ND=1000, prior_sig=1.0, bias="informative")
    loss, out = model.forward(x, y, net, net0, lrs=[0.1, 0.05], key=knoise,
                              Ninflate=1.0, nd=1.0)

    jax.block_until_ready((loss, out, net.grads))
    assert out.shape == (B, C)
    assert all(net.grads[k].shape == net.params[k].shape for k in net.params)
    assert math.isfinite(float(loss))
    print("KERNEL_OK")
</pallas_src>

<mosaic_0001>
module attributes {stable_mosaic.version = 11 : i64} {
  func.func @_sgld_step_kernel(%arg0: memref<4xf32, #tpu.memory_space<smem>>, %arg1: memref<8x1xi32, #tpu.memory_space<vmem>>, %arg2: memref<8x32xf32, #tpu.memory_space<vmem>>, %arg3: memref<176x128xf32, #tpu.memory_space<vmem>>, %arg4: memref<32x128xf32, #tpu.memory_space<vmem>>, %arg5: memref<1x128xf32, #tpu.memory_space<vmem>>, %arg6: memref<128x128xf32, #tpu.memory_space<vmem>>, %arg7: memref<1x128xf32, #tpu.memory_space<vmem>>, %arg8: memref<32x128xf32, #tpu.memory_space<vmem>>, %arg9: memref<1x128xf32, #tpu.memory_space<vmem>>, %arg10: memref<128x128xf32, #tpu.memory_space<vmem>>, %arg11: memref<1x128xf32, #tpu.memory_space<vmem>>, %arg12: memref<1x1xf32, #tpu.memory_space<vmem>>, %arg13: memref<8x128xf32, #tpu.memory_space<vmem>>, %arg14: memref<32x128xf32, #tpu.memory_space<vmem>>, %arg15: memref<1x128xf32, #tpu.memory_space<vmem>>, %arg16: memref<128x128xf32, #tpu.memory_space<vmem>>, %arg17: memref<1x128xf32, #tpu.memory_space<vmem>>) attributes {dimension_semantics = [], scalar_prefetch = 0 : i64, scratch_operands = 0 : i64, tpu.core_type = #tpu.core_type<tc>} {
    %c0 = arith.constant 0 : index
    %c0_0 = arith.constant 0 : index
    %0 = vector.load %arg2[%c0, %c0_0] : memref<8x32xf32, #tpu.memory_space<vmem>>, vector<8x32xf32>
    %c0_1 = arith.constant 0 : index
    %c0_2 = arith.constant 0 : index
    %1 = vector.load %arg4[%c0_1, %c0_2] : memref<32x128xf32, #tpu.memory_space<vmem>>, vector<32x128xf32>
    %c0_3 = arith.constant 0 : index
    %c0_4 = arith.constant 0 : index
    %2 = vector.load %arg5[%c0_3, %c0_4] : memref<1x128xf32, #tpu.memory_space<vmem>>, vector<1x128xf32>
    %c0_5 = arith.constant 0 : index
    %c0_6 = arith.constant 0 : index
    %3 = vector.load %arg6[%c0_5, %c0_6] : memref<128x128xf32, #tpu.memory_space<vmem>>, vector<128x128xf32>
    %c0_7 = arith.constant 0 : index
    %c0_8 = arith.constant 0 : index
    %4 = vector.load %arg7[%c0_7, %c0_8] : memref<1x128xf32, #tpu.memory_space<vmem>>, vector<1x128xf32>
    %cst = arith.constant dense<0.000000e+00> : vector<8x128xf32>
    %5 = tpu.matmul %0, %1, %cst {dimension_numbers = #tpu.dot_dimension_numbers<[1], [0], [0], [1], [0, 0, 1, 1], [], []>} : vector<8x32xf32>, vector<32x128xf32>, vector<8x128xf32> -> vector<8x128xf32>
    %6 = vector.broadcast %2 : vector<1x128xf32> to vector<8x128xf32>
    %7 = arith.addf %5, %6 : vector<8x128xf32>
    %cst_9 = arith.constant 0.000000e+00 : f32
    %8 = vector.broadcast %cst_9 : f32 to vector<8x128xf32>
    %9 = arith.maximumf %7, %8 : vector<8x128xf32>
    %cst_10 = arith.constant dense<0.000000e+00> : vector<8x128xf32>
    %10 = tpu.matmul %9, %3, %cst_10 {dimension_numbers = #tpu.dot_dimension_numbers<[1], [0], [0], [1], [0, 0, 1, 1], [], []>} : vector<8x128xf32>, vector<128x128xf32>, vector<8x128xf32> -> vector<8x128xf32>
    %11 = vector.broadcast %4 : vector<1x128xf32> to vector<8x128xf32>
    %12 = arith.addf %10, %11 : vector<8x128xf32>
    %c0_11 = arith.constant 0 : index
    %c0_12 = arith.constant 0 : index
    %13 = vector.load %arg13[%c0_11, %c0_12] : memref<8x128xf32, #tpu.memory_space<vmem>>, vector<8x128xf32>
    tpu.vector_store %arg13[%c0_11, %c0_12], %12 {strides = array<i32>} : memref<8x128xf32, #tpu.memory_space<vmem>>, vector<8x128xf32>,
    %14 = tpu.iota {dimensions = array<i32: 1>} : vector<8x128xi32>
    %c0_13 = arith.constant 0 : index
    %c0_14 = arith.constant 0 : index
    %15 = vector.load %arg1[%c0_13, %c0_14] : memref<8x1xi32, #tpu.memory_space<vmem>>, vector<8x1xi32>
    %16 = vector.broadcast %15 : vector<8x1xi32> to vector<8x128xi32>
    %17 = arith.cmpi eq, %14, %16 : vector<8x128xi32>
    %18 = arith.extui %17 : vector<8x128xi1> to vector<8x128xi32>
    %19 = arith.sitofp %18 : vector<8x128xi32> to vector<8x128xf32>
    %cst_15 = arith.constant dense<0xFF800000> : vector<8xf32>
    %20 = vector.multi_reduction <maximumf>, %12, %cst_15 [1] : vector<8x128xf32> to vector<8xf32>
    %21 = vector.shape_cast %20 : vector<8xf32> to vector<8x1xf32>
    %22 = vector.broadcast %21 : vector<8x1xf32> to vector<8x128xf32>
    %23 = arith.subf %12, %22 : vector<8x128xf32>
    %24 = math.exp %23 : vector<8x128xf32>
    %cst_16 = arith.constant dense<0.000000e+00> : vector<8xf32>
    %25 = vector.multi_reduction <add>, %24, %cst_16 [1] : vector<8x128xf32> to vector<8xf32>
    %26 = vector.shape_cast %25 : vector<8xf32> to vector<8x1xf32>
    %27 = vector.broadcast %26 : vector<8x1xf32> to vector<8x128xf32>
    %28 = arith.divf %24, %27 : vector<8x128xf32>
    %29 = math.log %26 : vector<8x1xf32>
    %30 = arith.addf %21, %29 : vector<8x1xf32>
    %31 = arith.mulf %19, %12 : vector<8x128xf32>
    %cst_17 = arith.constant dense<0.000000e+00> : vector<8xf32>
    %32 = vector.multi_reduction <add>, %31, %cst_17 [1] : vector<8x128xf32> to vector<8xf32>
    %33 = vector.shape_cast %32 : vector<8xf32> to vector<8x1xf32>
    %34 = arith.subf %30, %33 : vector<8x1xf32>
    %35 = vector.shape_cast %34 : vector<8x1xf32> to vector<1x8x1xf32>
    %cst_18 = arith.constant dense<0.000000e+00> : vector<1xf32>
    %36 = vector.multi_reduction <add>, %35, %cst_18 [1, 2] : vector<1x8x1xf32> to vector<1xf32>
    %37 = vector.shape_cast %36 : vector<1xf32> to vector<1x1x1xf32>
    %38 = vector.extract %37[0, 0, 0] : f32 from vector<1x1x1xf32>
    %cst_19 = arith.constant 1.250000e-01 : f32
    %39 = arith.mulf %38, %cst_19 : f32
    %40 = vector.broadcast %39 : f32 to vector<1x1xf32>
    %c0_20 = arith.constant 0 : index
    %c0_21 = arith.constant 0 : index
    %41 = vector.load %arg12[%c0_20, %c0_21] : memref<1x1xf32, #tpu.memory_space<vmem>>, vector<1x1xf32>
    tpu.vector_store %arg12[%c0_20, %c0_21], %40 {strides = array<i32>} : memref<1x1xf32, #tpu.memory_space<vmem>>, vector<1x1xf32>,
    %42 = arith.subf %28, %19 : vector<8x128xf32>
    %cst_22 = arith.constant 1.250000e-01 : f32
    %43 = vector.broadcast %cst_22 : f32 to vector<8x128xf32>
    %44 = arith.mulf %42, %43 : vector<8x128xf32>
    %cst_23 = arith.constant dense<0.000000e+00> : vector<128x128xf32>
    %45 = tpu.matmul %9, %44, %cst_23 {dimension_numbers = #tpu.dot_dimension_numbers<[0], [0], [1], [1], [0, 1, 1, 1], [], []>} : vector<8x128xf32>, vector<8x128xf32>, vector<128x128xf32> -> vector<128x128xf32>
    %cst_24 = arith.constant dense<0.000000e+00> : vector<128xf32>
    %46 = vector.multi_reduction <add>, %44, %cst_24 [0] : vector<8x128xf32> to vector<128xf32>
    %47 = vector.shape_cast %46 : vector<128xf32> to vector<1x128xf32>
    %cst_25 = arith.constant dense<0.000000e+00> : vector<8x128xf32>
    %48 = tpu.matmul %44, %3, %cst_25 {dimension_numbers = #tpu.dot_dimension_numbers<[1], [1], [0], [0], [0, 0, 1, 0], [], []>} : vector<8x128xf32>, vector<128x128xf32>, vector<8x128xf32> -> vector<8x128xf32>
    %cst_26 = arith.constant 0.000000e+00 : f32
    %49 = vector.broadcast %cst_26 : f32 to vector<8x128xf32>
    %50 = arith.cmpf ogt, %7, %49 : vector<8x128xf32>
    %cst_27 = arith.constant 0.000000e+00 : f32
    %51 = vector.broadcast %cst_27 : f32 to vector<8x128xf32>
    %52 = arith.select %50, %48, %51 : vector<8x128xi1>, vector<8x128xf32>
    %cst_28 = arith.constant dense<0.000000e+00> : vector<32x128xf32>
    %53 = tpu.matmul %0, %52, %cst_28 {dimension_numbers = #tpu.dot_dimension_numbers<[0], [0], [1], [1], [0, 1, 1, 1], [], []>} : vector<8x32xf32>, vector<8x128xf32>, vector<32x128xf32> -> vector<32x128xf32>
    %cst_29 = arith.constant dense<0.000000e+00> : vector<128xf32>
    %54 = vector.multi_reduction <add>, %52, %cst_29 [0] : vector<8x128xf32> to vector<128xf32>
    %55 = vector.shape_cast %54 : vector<128xf32> to vector<1x128xf32>
    %c0_30 = arith.constant 0 : index
    %56 = memref.load %arg0[%c0_30] : memref<4xf32, #tpu.memory_space<smem>>
    %c1 = arith.constant 1 : index
    %57 = memref.load %arg0[%c1] : memref<4xf32, #tpu.memory_space<smem>>
    %c2 = arith.constant 2 : index
    %58 = memref.load %arg0[%c2] : memref<4xf32, #tpu.memory_space<smem>>
    %c3 = arith.constant 3 : index
    %59 = memref.load %arg0[%c3] : memref<4xf32, #tpu.memory_space<smem>>
    %c0_31 = arith.constant 0 : index
    %c0_32 = arith.constant 0 : index
    %60 = vector.load %arg3[%c0_31, %c0_32] : memref<176x128xf32, #tpu.memory_space<vmem>>, vector<176x128xf32>
    %61 = vector.extract_strided_slice %60 {offsets = [0, 0], sizes = [32, 128], strides = [1, 1]} : vector<176x128xf32> to vector<32x128xf32>
    %62 = vector.extract_strided_slice %60 {offsets = [32, 0], sizes = [1, 128], strides = [1, 1]} : vector<176x128xf32> to vector<1x128xf32>
    %63 = vector.extract_strided_slice %60 {offsets = [40, 0], sizes = [128, 128], strides = [1, 1]} : vector<176x128xf32> to vector<128x128xf32>
    %64 = vector.extract_strided_slice %60 {offsets = [168, 0], sizes = [1, 128], strides = [1, 1]} : vector<176x128xf32> to vector<1x128xf32>
    %c0_33 = arith.constant 0 : index
    %c0_34 = arith.constant 0 : index
    %65 = vector.load %arg8[%c0_33, %c0_34] : memref<32x128xf32, #tpu.memory_space<vmem>>, vector<32x128xf32>
    %66 = arith.subf %1, %65 : vector<32x128xf32>
    %67 = vector.broadcast %56 : f32 to vector<32x128xf32>
    %68 = arith.mulf %67, %66 : vector<32x128xf32>
    %69 = arith.addf %53, %68 : vector<32x128xf32>
    %70 = vector.broadcast %57 : f32 to vector<32x128xf32>
    %71 = arith.mulf %70, %61 : vector<32x128xf32>
    %72 = arith.addf %69, %71 : vector<32x128xf32>
    %c0_35 = arith.constant 0 : index
    %c0_36 = arith.constant 0 : index
    %73 = vector.load %arg14[%c0_35, %c0_36] : memref<32x128xf32, #tpu.memory_space<vmem>>, vector<32x128xf32>
    tpu.vector_store %arg14[%c0_35, %c0_36], %72 {strides = array<i32>} : memref<32x128xf32, #tpu.memory_space<vmem>>, vector<32x128xf32>,
    %74 = arith.mulf %59, %56 : f32
    %c0_37 = arith.constant 0 : index
    %c0_38 = arith.constant 0 : index
    %75 = vector.load %arg9[%c0_37, %c0_38] : memref<1x128xf32, #tpu.memory_space<vmem>>, vector<1x128xf32>
    %76 = arith.subf %2, %75 : vector<1x128xf32>
    %77 = vector.broadcast %74 : f32 to vector<1x128xf32>
    %78 = arith.mulf %77, %76 : vector<1x128xf32>
    %79 = arith.addf %55, %78 : vector<1x128xf32>
    %80 = vector.broadcast %57 : f32 to vector<1x128xf32>
    %81 = arith.mulf %80, %62 : vector<1x128xf32>
    %82 = arith.addf %79, %81 : vector<1x128xf32>
    %c0_39 = arith.constant 0 : index
    %c0_40 = arith.constant 0 : index
    %83 = vector.load %arg15[%c0_39, %c0_40] : memref<1x128xf32, #tpu.memory_space<vmem>>, vector<1x128xf32>
    tpu.vector_store %arg15[%c0_39, %c0_40], %82 {strides = array<i32>} : memref<1x128xf32, #tpu.memory_space<vmem>>, vector<1x128xf32>,
    %84 = tpu.iota {dimensions = array<i32: 1>} : vector<128x128xi32>
    %c10_i32 = arith.constant 10 : i32
    %85 = vector.broadcast %c10_i32 : i32 to vector<128x128xi32>
    %86 = arith.cmpi slt, %84, %85 : vector<128x128xi32>
    %87 = tpu.iota {dimensions = array<i32: 1>} : vector<1x128xi32>
    %c10_i32_41 = arith.constant 10 : i32
    %88 = vector.broadcast %c10_i32_41 : i32 to vector<1x128xi32>
    %89 = arith.cmpi slt, %87, %88 : vector<1x128xi32>
    %c0_42 = arith.constant 0 : index
    %c0_43 = arith.constant 0 : index
    %90 = vector.load %arg10[%c0_42, %c0_43] : memref<128x128xf32, #tpu.memory_space<vmem>>, vector<128x128xf32>
    %91 = arith.subf %3, %90 : vector<128x128xf32>
    %92 = vector.broadcast %56 : f32 to vector<128x128xf32>
    %93 = arith.mulf %92, %91 : vector<128x128xf32>
    %94 = arith.addf %45, %93 : vector<128x128xf32>
    %95 = vector.broadcast %58 : f32 to vector<128x128xf32>
    %96 = arith.mulf %95, %63 : vector<128x128xf32>
    %97 = arith.addf %94, %96 : vector<128x128xf32>
    %cst_44 = arith.constant 0.000000e+00 : f32
    %98 = vector.broadcast %cst_44 : f32 to vector<128x128xf32>
    %99 = arith.select %86, %97, %98 : vector<128x128xi1>, vector<128x128xf32>
    %c0_45 = arith.constant 0 : index
    %c0_46 = arith.constant 0 : index
    %100 = vector.load %arg16[%c0_45, %c0_46] : memref<128x128xf32, #tpu.memory_space<vmem>>, vector<128x128xf32>
    tpu.vector_store %arg16[%c0_45, %c0_46], %99 {strides = array<i32>} : memref<128x128xf32, #tpu.memory_space<vmem>>, vector<128x128xf32>,
    %101 = arith.mulf %59, %56 : f32
    %c0_47 = arith.constant 0 : index
    %c0_48 = arith.constant 0 : index
    %102 = vector.load %arg11[%c0_47, %c0_48] : memref<1x128xf32, #tpu.memory_space<vmem>>, vector<1x128xf32>
    %103 = arith.subf %4, %102 : vector<1x128xf32>
    %104 = vector.broadcast %101 : f32 to vector<1x128xf32>
    %105 = arith.mulf %104, %103 : vector<1x128xf32>
    %106 = arith.addf %47, %105 : vector<1x128xf32>
    %107 = vector.broadcast %58 : f32 to vector<1x128xf32>
    %108 = arith.mulf %107, %64 : vector<1x128xf32>
    %109 = arith.addf %106, %108 : vector<1x128xf32>
    %cst_49 = arith.constant 0.000000e+00 : f32
    %110 = vector.broadcast %cst_49 : f32 to vector<1x128xf32>
    %111 = arith.select %89, %109, %110 : vector<1x128xi1>, vector<1x128xf32>
    %c0_50 = arith.constant 0 : index
    %c0_51 = arith.constant 0 : index
    %112 = vector.load %arg17[%c0_50, %c0_51] : memref<1x128xf32, #tpu.memory_space<vmem>>, vector<1x128xf32>
    tpu.vector_store %arg17[%c0_50, %c0_51], %111 {strides = array<i32>} : memref<1x128xf32, #tpu.memory_space<vmem>>, vector<1x128xf32>,
    return
  }
}

</mosaic_0001>

<llo_original>
// kernel: _sgld_step.1
$region0: #{_sgld_step.1}
  #allocation0 [shape = 'u32[]', space=smem, size = 0x4, offset = 0x4, fixed_abs, tag = 'smem constant byte address 0x4 - core index']
  #allocation1 [shape = 'u32[144,128]{1,0:T(1,128)}', space=vmem, size = 0x12000, scoped, tag = 'internal scratch']
  %s0 = inlined_call_operand.vmem [shape: f32[4], index: 0, kind: input, shape index: {}]
  %s1 = inlined_call_operand.vmem [shape: s32[8,1], index: 1, kind: input, shape index: {}]
  %s2 = inlined_call_operand.vmem [shape: f32[8,32], index: 2, kind: input, shape index: {}]
  %s3 = inlined_call_operand.vmem [shape: f32[176,128], index: 3, kind: input, shape index: {}]
  %s4 = inlined_call_operand.vmem [shape: f32[32,128], index: 4, kind: input, shape index: {}]
  %s5 = inlined_call_operand.vmem [shape: f32[1,128], index: 5, kind: input, shape index: {}]
  %s6 = inlined_call_operand.vmem [shape: f32[128,128], index: 6, kind: input, shape index: {}]
  %s7 = inlined_call_operand.vmem [shape: f32[1,128], index: 7, kind: input, shape index: {}]
  %s8 = inlined_call_operand.vmem [shape: f32[32,128], index: 8, kind: input, shape index: {}]
  %s9 = inlined_call_operand.vmem [shape: f32[1,128], index: 9, kind: input, shape index: {}]
  %s10 = inlined_call_operand.hbm [shape: f32[128,128], index: 10, kind: input, shape index: {}]
  %s11 = inlined_call_operand.vmem [shape: f32[1,128], index: 11, kind: input, shape index: {}]
  %s12 = inlined_call_operand.hbm [shape: f32[1,1], index: 12, kind: output, shape index: {0}]
  %s13 = inlined_call_operand.hbm [shape: f32[8,128], index: 13, kind: output, shape index: {1}]
  %s14 = inlined_call_operand.hbm [shape: f32[32,128], index: 14, kind: output, shape index: {2}]
  %s15 = inlined_call_operand.hbm [shape: f32[1,128], index: 15, kind: output, shape index: {3}]
  %s16 = inlined_call_operand.hbm [shape: f32[128,128], index: 16, kind: output, shape index: {4}]
  %s17 = inlined_call_operand.hbm [shape: f32[1,128], index: 17, kind: output, shape index: {5}]
  %18 = xla_tuple %s12, %s13, %s14, %s15, %s16, %s17
  %s19 = sld [smem:[#allocation0]]
  $region106: #{_sgld_step.1} parent=0
    _
  %s21 = ssub.s32 1, %s19
  %s22 = scalar_select 0, %s21, %s19
  $region1: #{_sgld_step.1} parent=0
    #allocation2 [shape = 'u8[512]{0}', space=smem, size = 0x200, scoped, tag = 'input window, operand 0, single buffered']
    #allocation3 [shape = 's32[1]{0}', space=sflag, size = 0x4, scoped, tag = 'scoped memory for _sgld_step.1']
    #allocation4 [shape = 's32[1]{0}', space=sflag, size = 0x4, scoped, tag = 'scoped memory for _sgld_step.1']
    #allocation5 [shape = 's32[1]{0}', space=sflag, size = 0x4, scoped, tag = 'scoped memory for _sgld_step.1']
    #allocation6 [shape = 'u8[65536]{0}', space=vmem, size = 0x10000, scoped, tag = 'input window, operand 10, single buffered']
    #allocation7 [shape = 'u8[512]{0}', space=vmem, size = 0x400, scoped, tag = 'output window, operand 0, single buffered']
    #allocation8 [shape = 'u8[4096]{0}', space=vmem, size = 0x1000, scoped, tag = 'output window, operand 1, single buffered']
    #allocation9 [shape = 's32[1]{0}', space=sflag, size = 0x4, scoped, tag = 'scoped memory for _sgld_step.1']
    #allocation10 [shape = 'u8[16384]{0}', space=vmem, size = 0x4000, scoped, tag = 'output window, operand 2, single buffered']
    #allocation11 [shape = 'u8[512]{0}', space=vmem, size = 0x400, scoped, tag = 'output window, operand 3, single buffered']
    #allocation12 [shape = 's32[1]{0}', space=sflag, size = 0x4, scoped, tag = 'scoped memory for _sgld_step.1']
    #allocation13 [shape = 'u8[65536]{0}', space=vmem, size = 0x10000, scoped, tag = 'output window, operand 4, single buffered']
    #allocation14 [shape = 'u8[512]{0}', space=vmem, size = 0x400, scoped, tag = 'output window, operand 5, single buffered']
    #allocation15 [shape = 's32[1]{0}', space=sflag, size = 0x4, scoped, tag = 'scoped memory for _sgld_step.1']
    %23 = vsyncpa [#allocation5], 0
    %24 = vsyncpa [#allocation3], 0
    %25 = vsyncpa [#allocation4], 0
    %26 = vsyncpa [#allocation9], 0
    %27 = vsyncpa [#allocation12], 0
    %28 = vsyncpa [#allocation15], 0
    // Predicated region
    $region2: #{_sgld_step.1} parent=1 // pred_check
      _
    $region3: #{_sgld_step.1} parent=1 // pred_check_branch
      %30 = sbr.rel (0) target = $region5
    $region4: #{_sgld_step.1} parent=1 // pred_region
      %s32 = ssub.s32 16, 16
      %33 = vsyncadd [#allocation5], %s32
      %s35 = sshll.u32 %s0, 4
      %s36 = int_to_ptr.vmem [resolvable:$true] %s35
      %38 = dma.vmem_to_smem %s36, 16, [#allocation2], [#allocation5]
    $region5: #{_sgld_step.1} parent=1 // pred_fallthru
      _
    // Predicated region
    $region6: #{_sgld_step.1} parent=1 // pred_check
      _
    $region7: #{_sgld_step.1} parent=1 // pred_check_branch
      %40 = sbr.rel (0) target = $region9
    $region8: #{_sgld_step.1} parent=1 // pred_region
      _
    $region9: #{_sgld_step.1} parent=1 // pred_fallthru
      _
    // Predicated region
    $region10: #{_sgld_step.1} parent=1 // pred_check
      _
    $region11: #{_sgld_step.1} parent=1 // pred_check_branch
      %42 = sbr.rel (0) target = $region13
    $region12: #{_sgld_step.1} parent=1 // pred_region
      _
    $region13: #{_sgld_step.1} parent=1 // pred_fallthru
      _
    // Predicated region
    $region14: #{_sgld_step.1} parent=1 // pred_check
      _
    $region15: #{_sgld_step.1} parent=1 // pred_check_branch
      %44 = sbr.rel (0) target = $region17
    $region16: #{_sgld_step.1} parent=1 // pred_region
      _
    $region17: #{_sgld_step.1} parent=1 // pred_fallthru
      _
    // Predicated region
    $region18: #{_sgld_step.1} parent=1 // pred_check
      _
    $region19: #{_sgld_step.1} parent=1 // pred_check_branch
      %46 = sbr.rel (0) target = $region21
    $region20: #{_sgld_step.1} parent=1 // pred_region
      _
    $region21: #{_sgld_step.1} parent=1 // pred_fallthru
      _
    // Predicated region
    $region22: #{_sgld_step.1} parent=1 // pred_check
      _
    $region23: #{_sgld_step.1} parent=1 // pred_check_branch
      %48 = sbr.rel (0) target = $region25
    $region24: #{_sgld_step.1} parent=1 // pred_region
      _
    $region25: #{_sgld_step.1} parent=1 // pred_fallthru
      _
    // Predicated region
    $region26: #{_sgld_step.1} parent=1 // pred_check
      _
    $region27: #{_sgld_step.1} parent=1 // pred_check_branch
      %50 = sbr.rel (0) target = $region29
    $region28: #{_sgld_step.1} parent=1 // pred_region
      _
    $region29: #{_sgld_step.1} parent=1 // pred_fallthru
      _
    // Predicated region
    $region30: #{_sgld_step.1} parent=1 // pred_check
      _
    $region31: #{_sgld_step.1} parent=1 // pred_check_branch
      %52 = sbr.rel (0) target = $region33
    $region32: #{_sgld_step.1} parent=1 // pred_region
      _
    $region33: #{_sgld_step.1} parent=1 // pred_fallthru
      _
    // Predicated region
    $region34: #{_sgld_step.1} parent=1 // pred_check
      _
    $region35: #{_sgld_step.1} parent=1 // pred_check_branch
      %54 = sbr.rel (0) target = $region37
    $region36: #{_sgld_step.1} parent=1 // pred_region
      _
    $region37: #{_sgld_step.1} parent=1 // pred_fallthru
      _
    // Predicated region
    $region38: #{_sgld_step.1} parent=1 // pred_check
      _
    $region39: #{_sgld_step.1} parent=1 // pred_check_branch
      %56 = sbr.rel (0) target = $region41
    $region40: #{_sgld_step.1} parent=1 // pred_region
      _
    $region41: #{_sgld_step.1} parent=1 // pred_fallthru
      _
    // Predicated region
    $region42: #{_sgld_step.1} parent=1 // pred_check
      _
    $region43: #{_sgld_step.1} parent=1 // pred_check_branch
      %58 = sbr.rel (0) target = $region45
    $region44: #{_sgld_step.1} parent=1 // pred_region
      %s60 = ssub.s32 2048, 2048
      %61 = vsyncadd [#allocation3], %s60
      %s62 = sshll.u32 [#allocation6], 4
      %s63 = int_to_ptr.vmem [resolvable:$true] %s62
      %68 = dma.hbm_to_vmem [thread:$0]  %s10, 2048, %s63, [#allocation3], 128, 128, 8
    $region45: #{_sgld_step.1} parent=1 // pred_fallthru
      _
    // Predicated region
    $region46: #{_sgld_step.1} parent=1 // pred_check
      _
    $region47: #{_sgld_step.1} parent=1 // pred_check_branch
      %70 = sbr.rel (0) target = $region49
    $region48: #{_sgld_step.1} parent=1 // pred_region
      _
    $region49: #{_sgld_step.1} parent=1 // pred_fallthru
      _
    // Predicated region
    $region50: #{_sgld_step.1} parent=1 // pred_check
      _
    $region51: #{_sgld_step.1} parent=1 // pred_check_branch
      %72 = sbr.rel (0) target = $region53
    $region52: #{_sgld_step.1} parent=1 // pred_region
      %73 = dma.done [#allocation5], 16
    $region53: #{_sgld_step.1} parent=1 // pred_fallthru
      _
    // Predicated region
    $region54: #{_sgld_step.1} parent=1 // pred_check
      _
    $region55: #{_sgld_step.1} parent=1 // pred_check_branch
      %75 = sbr.rel (0) target = $region57
    $region56: #{_sgld_step.1} parent=1 // pred_region
      %76 = dma.done [#allocation3], 2048
    $region57: #{_sgld_step.1} parent=1 // pred_fallthru
      _
    %77 = sfence
    %v78 = vld [vmem:[%s2] sm:$0xff]
    %v79 = vld [vmem:[%s4] sm:$0xff]
    %v80 = vld [vmem:[%s4 + $0x8] sm:$0xff]
    %v81 = vld [vmem:[%s4 + $0x10] sm:$0xff]
    %v82 = vld [vmem:[%s4 + $0x18] sm:$0xff]
    %v83 = vld [vmem:[%s5] sm:$0x1]
    %v84 = vld [vmem:[%s6] sm:$0xff]
    %v85 = vld [vmem:[%s6 + $0x8] sm:$0xff]
    %v86 = vld [vmem:[%s6 + $0x10] sm:$0xff]
    %v87 = vld [vmem:[%s6 + $0x18] sm:$0xff]
    %v88 = vld [vmem:[%s6 + $0x20] sm:$0xff]
    %v89 = vld [vmem:[%s6 + $0x28] sm:$0xff]
    %v90 = vld [vmem:[%s6 + $0x30] sm:$0xff]
    %v91 = vld [vmem:[%s6 + $0x38] sm:$0xff]
    %v92 = vld [vmem:[%s6 + $0x40] sm:$0xff]
    %v93 = vld [vmem:[%s6 + $0x48] sm:$0xff]
    %v94 = vld [vmem:[%s6 + $0x50] sm:$0xff]
    %v95 = vld [vmem:[%s6 + $0x58] sm:$0xff]
    %v96 = vld [vmem:[%s6 + $0x60] sm:$0xff]
    %v97 = vld [vmem:[%s6 + $0x68] sm:$0xff]
    %v98 = vld [vmem:[%s6 + $0x70] sm:$0xff]
    %v99 = vld [vmem:[%s6 + $0x78] sm:$0xff]
    %v100 = vld [vmem:[%s7] sm:$0x1]
    %v102 = vlaneseq
    %v103 = vshrl.u32 %v102, 7
    %v104 = vsub.s32 0, %v103
    %v105 = vrot.slane %v83, %v104
    %vm107 = vcmask 261120
    %v109 = vsel %vm107, %v78, 0
    %111 = vmatprep.subr.mxu0 0.0
    %112 = vmatpush1.msra.mxu0 0.0
    %113 = vmatprep.subr.mxu0 0.0
    %114 = vmatpush1.msra.mxu0 0.0
    %115 = vmatprep.subr.mxu0 0.0
    %116 = vmatpush1.msra.mxu0 0.0
    %117 = vmatprep.subr.mxu0 0.0
    %118 = vmatpush1.msra.mxu0 0.0
    %119 = vmatprep.subr.mxu0 0.0
    %120 = vmatpush1.msra.mxu0 0.0
    %121 = vmatprep.subr.mxu0 0.0
    %122 = vmatpush1.msra.mxu0 0.0
    %123 = vmatprep.subr.mxu0 0.0
    %124 = vmatpush1.msra.mxu0 0.0
    %125 = vmatprep.subr.mxu0 0.0
    %126 = vmatpush1.msra.mxu0 0.0
    %127 = vmatprep.subr.mxu0 0.0
    %128 = vmatpush1.msra.mxu0 0.0
    %129 = vmatprep.subr.mxu0 0.0
    %130 = vmatpush1.msra.mxu0 0.0
    %131 = vmatprep.subr.mxu0 0.0
    %132 = vmatpush1.msra.mxu0 0.0
    %133 = vmatprep.subr.mxu0 0.0
    %134 = vmatpush1.msra.mxu0 0.0
    %135 = vmatprep.subr.mxu0 0.0
    %136 = vmatpush1.msra.mxu0 %v82
    %137 = vmatprep.subr.mxu0 0.0
    %138 = vmatpush1.msra.mxu0 %v81
    %139 = vmatprep.subr.mxu0 0.0
    %140 = vmatpush1.msra.mxu0 %v80
    %141 = vmatprep.subr.mxu0 0.0
    %142 = vmatpush1.msra.mxu0 %v79
    %143 = vmatprep.subr.mxu0 0.0
    %144 = vmatpush2.msra.mxu0 0.0
    %145 = vmatprep.subr.mxu0 0.0
    %146 = vmatpush2.msra.mxu0 0.0
    %147 = vmatprep.subr.mxu0 0.0
    %148 = vmatpush2.msra.mxu0 0.0
    %149 = vmatprep.subr.mxu0 0.0
    %150 = vmatpush2.msra.mxu0 0.0
    %151 = vmatprep.subr.mxu0 0.0
    %152 = vmatpush2.msra.mxu0 0.0
    %153 = vmatprep.subr.mxu0 0.0
    %154 = vmatpush2.msra.mxu0 0.0
    %155 = vmatprep.subr.mxu0 0.0
    %156 = vmatpush2.msra.mxu0 0.0
    %157 = vmatprep.subr.mxu0 0.0
    %158 = vmatpush2.msra.mxu0 0.0
    %159 = vmatprep.subr.mxu0 0.0
    %160 = vmatpush2.msra.mxu0 0.0
    %161 = vmatprep.subr.mxu0 0.0
    %162 = vmatpush2.msra.mxu0 0.0
    %163 = vmatprep.subr.mxu0 0.0
    %164 = vmatpush2.msra.mxu0 0.0
    %165 = vmatprep.subr.mxu0 0.0
    %166 = vmatpush2.msra.mxu0 0.0
    %167 = vmatprep.subr.mxu0 0.0
    %168 = vmatpush2.msra.mxu0 0.0
    %169 = vmatprep.subr.mxu0 0.0
    %170 = vmatpush2.msra.mxu0 0.0
    %171 = vmatprep.subr.mxu0 0.0
    %172 = vmatpush2.msra.mxu0 0.0
    %173 = vmatprep.subr.mxu0 0.0
    %174 = vmatpush2.msra.mxu0 0.0
    %175 = vmatprep.mubr.f32.mxu0 0.0
    %176 = vmatmul.mubr.f32.gmra.mxu0 %v109
    %v177 = vpop.f32.mrf.mxu0
    %v178 = vadd.f32 %v105, %v177
    %v179 = vpop.f32.mrf.mxu0
    %180 = vdwg.mxu0
    %v181 = vmax.f32 %v178, 0.0
    %v183 = vlaneseq
    %v184 = vshrl.u32 %v183, 7
    %v185 = vsub.s32 0, %v184
    %v186 = vrot.slane %v100, %v185
    %188 = vmatprep.subr.mxu0 0.0
    %189 = vmatpush1.msra.mxu0 %v99
    %190 = vmatprep.subr.mxu0 0.0
    %191 = vmatpush1.msra.mxu0 %v98
    %192 = vmatprep.subr.mxu0 0.0
    %193 = vmatpush1.msra.mxu0 %v97
    %194 = vmatprep.subr.mxu0 0.0
    %195 = vmatpush1.msra.mxu0 %v96
    %196 = vmatprep.subr.mxu0 0.0
    %197 = vmatpush1.msra.mxu0 %v95
    %198 = vmatprep.subr.mxu0 0.0
    %199 = vmatpush1.msra.mxu0 %v94
    %200 = vmatprep.subr.mxu0 0.0
    %201 = vmatpush1.msra.mxu0 %v93
    %202 = vmatprep.subr.mxu0 0.0
    %203 = vmatpush1.msra.mxu0 %v92
    %204 = vmatprep.subr.mxu0 0.0
    %205 = vmatpush1.msra.mxu0 %v91
    %206 = vmatprep.subr.mxu0 0.0
    %207 = vmatpush1.msra.mxu0 %v90
    %208 = vmatprep.subr.mxu0 0.0
    %209 = vmatpush1.msra.mxu0 %v89
    %210 = vmatprep.subr.mxu0 0.0
    %211 = vmatpush1.msra.mxu0 %v88
    %212 = vmatprep.subr.mxu0 0.0
    %213 = vmatpush1.msra.mxu0 %v87
    %214 = vmatprep.subr.mxu0 0.0
    %215 = vmatpush1.msra.mxu0 %v86
    %216 = vmatprep.subr.mxu0 0.0
    %217 = vmatpush1.msra.mxu0 %v85
    %218 = vmatprep.subr.mxu0 0.0
    %219 = vmatpush1.msra.mxu0 %v84
    %220 = vmatprep.subr.mxu0 0.0
    %221 = vmatpush2.msra.mxu0 0.0
    %222 = vmatprep.subr.mxu0 0.0
    %223 = vmatpush2.msra.mxu0 0.0
    %224 = vmatprep.subr.mxu0 0.0
    %225 = vmatpush2.msra.mxu0 0.0
    %226 = vmatprep.subr.mxu0 0.0
    %227 = vmatpush2.msra.mxu0 0.0
    %228 = vmatprep.subr.mxu0 0.0
    %229 = vmatpush2.msra.mxu0 0.0
    %230 = vmatprep.subr.mxu0 0.0
    %231 = vmatpush2.msra.mxu0 0.0
    %232 = vmatprep.subr.mxu0 0.0
    %233 = vmatpush2.msra.mxu0 0.0
    %234 = vmatprep.subr.mxu0 0.0
    %235 = vmatpush2.msra.mxu0 0.0
    %236 = vmatprep.subr.mxu0 0.0
    %237 = vmatpush2.msra.mxu0 0.0
    %238 = vmatprep.subr.mxu0 0.0
    %239 = vmatpush2.msra.mxu0 0.0
    %240 = vmatprep.subr.mxu0 0.0
    %241 = vmatpush2.msra.mxu0 0.0
    %242 = vmatprep.subr.mxu0 0.0
    %243 = vmatpush2.msra.mxu0 0.0
    %244 = vmatprep.subr.mxu0 0.0
    %245 = vmatpush2.msra.mxu0 0.0
    %246 = vmatprep.subr.mxu0 0.0
    %247 = vmatpush2.msra.mxu0 0.0
    %248 = vmatprep.subr.mxu0 0.0
    %249 = vmatpush2.msra.mxu0 0.0
    %250 = vmatprep.subr.mxu0 0.0
    %251 = vmatpush2.msra.mxu0 0.0
    %252 = vmatprep.mubr.f32.mxu0 0.0
    %253 = vmatmul.mubr.f32.gmra.mxu0 %v181
    %v254 = vpop.f32.mrf.mxu0
    %v255 = vadd.f32 %v186, %v254
    %v256 = vpop.f32.mrf.mxu0
    %257 = vdwg.mxu0
    %258 = vst [vmem:[#allocation8] sm:$0xff] %v255
    %v259 = vlaneseq
    %v260 = vand.u32 %v259, 127
    %v261 = vld [vmem:[%s1] sm:$0xff]
    %262 = vset.pattern.permute.xlu0 0
    %263 = vperm.xlu0 %262, %v261
    %v264 = vpop.permute.xlu0 %263
    %vm265 = vcmp.eq.s32.totalorder %v260, %v264
    %v266 = vsel %vm265, 1, 0
    %v267 = vcvt.s32.f32 %v266
    %268 = vmax.xlane.f32.xlu0 %v255
    %v269 = vpop.xlane.xlu0 %268
    %v270 = vsub.f32 %v255, %v269
    %v271 = vmul.f32 %v270, 1.442695
    %v272 = vpow.pop %v271
    %273 = vadd.xlane.f32.xlu0 %v272
    %v274 = vpop.xlane.xlu0 %273
    %v275 = vrcp.pop %v274
    %v276 = vmul.f32 %v272, %v275
    %v277 = vlog2.pop %v274
    %v278 = vmul.f32 %v277, 0.6931472
    %v279 = vadd.f32 %v269, %v278
    %v280 = vmul.f32 %v267, %v255
    %281 = vadd.xlane.f32.xlu0 %v280
    %v282 = vpop.xlane.xlu0 %281
    %v283 = vsub.f32 %v279, %v282
    %vm284 = vcmask 7168
    %v285 = vsel %vm284, %v283, 0.0
    %286 = vadd.xlane.f32.xlu0 %v285
    %v287 = vpop.xlane.xlu0 %286
    %v288 = vrot.slane %v287, 4
    %v289 = vadd.f32 %v287, %v288
    %v290 = vrot.slane %v289, 2
    %v291 = vadd.f32 %v289, %v290
    %v292 = vrot.slane %v291, 1
    %v293 = vadd.f32 %v291, %v292
    %s294 = vtos %v293
    %s295 = smul.f32 %s294, 0.125
    %v296 = vstv %s295
    %vm297 = vcmask 0
    %298 = vst.msk [vmem:[#allocation7] sm:$0x1] %vm297, %v296
    %v299 = vsub.f32 %v276, %v267
    %v300 = vmul.f32 %v299, 0.125
    %v301 = vrot.slane %v300, 4
    %v302 = vadd.f32 %v300, %v301
    %v303 = vrot.slane %v302, 2
    %v304 = vadd.f32 %v302, %v303
    %v305 = vrot.slane %v304, 1
    %v306 = vadd.f32 %v304, %v305
    %307 = vmatprep.subr.mxu0 0.0
    %308 = vmatpush1.xpose.msra.mxu0 %v99
    %309 = vmatprep.subr.mxu0 0.0
    %310 = vmatpush1.xpose.msra.mxu0 %v98
    %311 = vmatprep.subr.mxu0 0.0
    %312 = vmatpush1.xpose.msra.mxu0 %v97
    %313 = vmatprep.subr.mxu0 0.0
    %314 = vmatpush1.xpose.msra.mxu0 %v96
    %315 = vmatprep.subr.mxu0 0.0
    %316 = vmatpush1.xpose.msra.mxu0 %v95
    %317 = vmatprep.subr.mxu0 0.0
    %318 = vmatpush1.xpose.msra.mxu0 %v94
    %319 = vmatprep.subr.mxu0 0.0
    %320 = vmatpush1.xpose.msra.mxu0 %v93
    %321 = vmatprep.subr.mxu0 0.0
    %322 = vmatpush1.xpose.msra.mxu0 %v92
    %323 = vmatprep.subr.mxu0 0.0
    %324 = vmatpush1.xpose.msra.mxu0 %v91
    %325 = vmatprep.subr.mxu0 0.0
    %326 = vmatpush1.xpose.msra.mxu0 %v90
    %327 = vmatprep.subr.mxu0 0.0
    %328 = vmatpush1.xpose.msra.mxu0 %v89
    %329 = vmatprep.subr.mxu0 0.0
    %330 = vmatpush1.xpose.msra.mxu0 %v88
    %331 = vmatprep.subr.mxu0 0.0
    %332 = vmatpush1.xpose.msra.mxu0 %v87
    %333 = vmatprep.subr.mxu0 0.0
    %334 = vmatpush1.xpose.msra.mxu0 %v86
    %335 = vmatprep.subr.mxu0 0.0
    %336 = vmatpush1.xpose.msra.mxu0 %v85
    %337 = vmatprep.subr.mxu0 0.0
    %338 = vmatpush1.xpose.msra.mxu0 %v84
    %339 = vmatprep.subr.mxu0 0.0
    %340 = vmatpush2.xpose.msra.mxu0 0.0
    %341 = vmatprep.subr.mxu0 0.0
    %342 = vmatpush2.xpose.msra.mxu0 0.0
    %343 = vmatprep.subr.mxu0 0.0
    %344 = vmatpush2.xpose.msra.mxu0 0.0
    %345 = vmatprep.subr.mxu0 0.0
    %346 = vmatpush2.xpose.msra.mxu0 0.0
    %347 = vmatprep.subr.mxu0 0.0
    %348 = vmatpush2.xpose.msra.mxu0 0.0
    %349 = vmatprep.subr.mxu0 0.0
    %350 = vmatpush2.xpose.msra.mxu0 0.0
    %351 = vmatprep.subr.mxu0 0.0
    %352 = vmatpush2.xpose.msra.mxu0 0.0
    %353 = vmatprep.subr.mxu0 0.0
    %354 = vmatpush2.xpose.msra.mxu0 0.0
    %355 = vmatprep.subr.mxu0 0.0
    %356 = vmatpush2.xpose.msra.mxu0 0.0
    %357 = vmatprep.subr.mxu0 0.0
    %358 = vmatpush2.xpose.msra.mxu0 0.0
    %359 = vmatprep.subr.mxu0 0.0
    %360 = vmatpush2.xpose.msra.mxu0 0.0
    %361 = vmatprep.subr.mxu0 0.0
    %362 = vmatpush2.xpose.msra.mxu0 0.0
    %363 = vmatprep.subr.mxu0 0.0
    %364 = vmatpush2.xpose.msra.mxu0 0.0
    %365 = vmatprep.subr.mxu0 0.0
    %366 = vmatpush2.xpose.msra.mxu0 0.0
    %367 = vmatprep.subr.mxu0 0.0
    %368 = vmatpush2.xpose.msra.mxu0 0.0
    %369 = vmatprep.subr.mxu0 0.0
    %370 = vmatpush2.xpose.msra.mxu0 0.0
    %371 = vmatprep.mubr.f32.mxu0 0.0
    %372 = vmatmul.mubr.f32.gmra.mxu0 %v300
    %v373 = vpop.f32.mrf.mxu0
    %v374 = vadd.f32 0.0, %v373
    %v375 = vpop.f32.mrf.mxu0
    %376 = vdwg.mxu0
    %vm377 = vcmp.gt.f32.partialorder %v178, 0.0
    %v378 = vsel %vm377, %v374, 0.0
    %v379 = vrot.slane %v378, 4
    %v380 = vadd.f32 %v378, %v379
    %v381 = vrot.slane %v380, 2
    %v382 = vadd.f32 %v380, %v381
    %v383 = vrot.slane %v382, 1
    %v384 = vadd.f32 %v382, %v383
    %s385 = sld [smem:[#allocation2]]
    %s386 = sld [smem:[#allocation2 + $0x1]]
    %s387 = sld [smem:[#allocation2 + $0x2]]
    %s388 = sld [smem:[#allocation2 + $0x3]]
    %v389 = vld [vmem:[%s3] sm:$0xff]
    %v390 = vld [vmem:[%s3 + $0x8] sm:$0xff]
    %v391 = vld [vmem:[%s3 + $0x10] sm:$0xff]
    %v392 = vld [vmem:[%s3 + $0x18] sm:$0xff]
    %v393 = vld [vmem:[%s3 + $0x20] sm:$0xff]
    %v394 = vld [vmem:[%s3 + $0x28] sm:$0xff]
    %v395 = vld [vmem:[%s3 + $0x30] sm:$0xff]
    %v396 = vld [vmem:[%s3 + $0x38] sm:$0xff]
    %v397 = vld [vmem:[%s3 + $0x40] sm:$0xff]
    %v398 = vld [vmem:[%s3 + $0x48] sm:$0xff]
    %v399 = vld [vmem:[%s3 + $0x50] sm:$0xff]
    %v400 = vld [vmem:[%s3 + $0x58] sm:$0xff]
    %v401 = vld [vmem:[%s3 + $0x60] sm:$0xff]
    %v402 = vld [vmem:[%s3 + $0x68] sm:$0xff]
    %v403 = vld [vmem:[%s3 + $0x70] sm:$0xff]
    %v404 = vld [vmem:[%s3 + $0x78] sm:$0xff]
    %v405 = vld [vmem:[%s3 + $0x80] sm:$0xff]
    %v406 = vld [vmem:[%s3 + $0x88] sm:$0xff]
    %v407 = vld [vmem:[%s3 + $0x90] sm:$0xff]
    %v408 = vld [vmem:[%s3 + $0x98] sm:$0xff]
    %v409 = vld [vmem:[%s3 + $0xa0] sm:$0xff]
    %v410 = vld [vmem:[%s3 + $0xa8] sm:$0xff]
    %v411 = vld [vmem:[%s8] sm:$0xff]
    %v412 = vld [vmem:[%s8 + $0x8] sm:$0xff]
    %v413 = vld [vmem:[%s8 + $0x10] sm:$0xff]
    %v414 = vld [vmem:[%s8 + $0x18] sm:$0xff]
    %v415 = vsub.f32 %v79, %v411
    %v416 = vsub.f32 %v80, %v412
    %v417 = vsub.f32 %v81, %v413
    %v418 = vsub.f32 %v82, %v414
    %v419 = vstv %s385
    %v420 = vmul.f32 %v419, %v415
    %v421 = vmul.f32 %v419, %v416
    %v422 = vmul.f32 %v419, %v417
    %v423 = vmul.f32 %v419, %v418
    %424 = vxpose.xlu0.b32.start [1/16] %v78, 128
    %425 = vxpose.xlu0.b32.cont [2/16] 0.0, 128
    %426 = vxpose.xlu0.b32.cont [3/16] 0.0, 128
    %427 = vxpose.xlu0.b32.cont [4/16] 0.0, 128
    %428 = vxpose.xlu0.b32.cont [5/16] 0.0, 128
    %429 = vxpose.xlu0.b32.cont [6/16] 0.0, 128
    %430 = vxpose.xlu0.b32.cont [7/16] 0.0, 128
    %431 = vxpose.xlu0.b32.cont [8/16] 0.0, 128
    %432 = vxpose.xlu0.b32.cont [9/16] 0.0, 128
    %433 = vxpose.xlu0.b32.cont [10/16] 0.0, 128
    %434 = vxpose.xlu0.b32.cont [11/16] 0.0, 128
    %435 = vxpose.xlu0.b32.cont [12/16] 0.0, 128
    %436 = vxpose.xlu0.b32.cont [13/16] 0.0, 128
    %437 = vxpose.xlu0.b32.cont [14/16] 0.0, 128
    %438 = vxpose.xlu0.b32.cont [15/16] 0.0, 128
    %439 = vxpose.xlu0.b32.end [16/16] 0.0, 128
    %v440 = vpop.trf.xlu0
    %v441 = vpop.trf.xlu0
    %v442 = vpop.trf.xlu0
    %v443 = vpop.trf.xlu0
    %v444 = vpop.trf.xlu0
    %v445 = vpop.trf.xlu0
    %v446 = vpop.trf.xlu0
    %v447 = vpop.trf.xlu0
    %v448 = vpop.trf.xlu0
    %v449 = vpop.trf.xlu0
    %v450 = vpop.trf.xlu0
    %v451 = vpop.trf.xlu0
    %v452 = vpop.trf.xlu0
    %v453 = vpop.trf.xlu0
    %v454 = vpop.trf.xlu0
    %v455 = vpop.trf.xlu0
    %vm456 = vcmask 64512
    %v458 = vsel %vm456, %v440, 0
    %v461 = vsel %vm456, %v441, 0
    %v464 = vsel %vm456, %v442, 0
    %v467 = vsel %vm456, %v443, 0
    %469 = vmatprep.subr.mxu0 0.0
    %470 = vmatpush1.msra.mxu0 0.0
    %471 = vmatprep.subr.mxu0 0.0
    %472 = vmatpush1.msra.mxu0 0.0
    %473 = vmatprep.subr.mxu0 0.0
    %474 = vmatpush1.msra.mxu0 0.0
    %475 = vmatprep.subr.mxu0 0.0
    %476 = vmatpush1.msra.mxu0 0.0
    %477 = vmatprep.subr.mxu0 0.0
    %478 = vmatpush1.msra.mxu0 0.0
    %479 = vmatprep.subr.mxu0 0.0
    %480 = vmatpush1.msra.mxu0 0.0
    %481 = vmatprep.subr.mxu0 0.0
    %482 = vmatpush1.msra.mxu0 0.0
    %483 = vmatprep.subr.mxu0 0.0
    %484 = vmatpush1.msra.mxu0 0.0
    %485 = vmatprep.subr.mxu0 0.0
    %486 = vmatpush1.msra.mxu0 0.0
    %487 = vmatprep.subr.mxu0 0.0
    %488 = vmatpush1.msra.mxu0 0.0
    %489 = vmatprep.subr.mxu0 0.0
    %490 = vmatpush1.msra.mxu0 0.0
    %491 = vmatprep.subr.mxu0 0.0
    %492 = vmatpush1.msra.mxu0 0.0
    %493 = vmatprep.subr.mxu0 0.0
    %494 = vmatpush1.msra.mxu0 0.0
    %495 = vmatprep.subr.mxu0 0.0
    %496 = vmatpush1.msra.mxu0 0.0
    %497 = vmatprep.subr.mxu0 0.0
    %498 = vmatpush1.msra.mxu0 0.0
    %499 = vmatprep.subr.mxu0 0.0
    %500 = vmatpush1.msra.mxu0 %v378
    %501 = vmatprep.subr.mxu0 0.0
    %502 = vmatpush2.msra.mxu0 0.0
    %503 = vmatprep.subr.mxu0 0.0
    %504 = vmatpush2.msra.mxu0 0.0
    %505 = vmatprep.subr.mxu0 0.0
    %506 = vmatpush2.msra.mxu0 0.0
    %507 = vmatprep.subr.mxu0 0.0
    %508 = vmatpush2.msra.mxu0 0.0
    %509 = vmatprep.subr.mxu0 0.0
    %510 = vmatpush2.msra.mxu0 0.0
    %511 = vmatprep.subr.mxu0 0.0
    %512 = vmatpush2.msra.mxu0 0.0
    %513 = vmatprep.subr.mxu0 0.0
    %514 = vmatpush2.msra.mxu0 0.0
    %515 = vmatprep.subr.mxu0 0.0
    %516 = vmatpush2.msra.mxu0 0.0
    %517 = vmatprep.subr.mxu0 0.0
    %518 = vmatpush2.msra.mxu0 0.0
    %519 = vmatprep.subr.mxu0 0.0
    %520 = vmatpush2.msra.mxu0 0.0
    %521 = vmatprep.subr.mxu0 0.0
    %522 = vmatpush2.msra.mxu0 0.0
    %523 = vmatprep.subr.mxu0 0.0
    %524 = vmatpush2.msra.mxu0 0.0
    %525 = vmatprep.subr.mxu0 0.0
    %526 = vmatpush2.msra.mxu0 0.0
    %527 = vmatprep.subr.mxu0 0.0
    %528 = vmatpush2.msra.mxu0 0.0
    %529 = vmatprep.subr.mxu0 0.0
    %530 = vmatpush2.msra.mxu0 0.0
    %531 = vmatprep.subr.mxu0 0.0
    %532 = vmatpush2.msra.mxu0 0.0
    %533 = vmatprep.mubr.f32.mxu0 0.0
    %534 = vmatmul.mubr.f32.gmra.mxu0 %v458
    %v535 = vpop.f32.mrf.mxu0
    %v536 = vadd.f32 %v420, %v535
    %v537 = vpop.f32.mrf.mxu0
    %538 = vmatprep.mubr.f32.mxu0 0.0
    %539 = vmatmul.mubr.f32.gmra.mxu0 %v461
    %v540 = vpop.f32.mrf.mxu0
    %v541 = vadd.f32 %v421, %v540
    %v542 = vpop.f32.mrf.mxu0
    %543 = vmatprep.mubr.f32.mxu0 0.0
    %544 = vmatmul.mubr.f32.gmra.mxu0 %v464
    %v545 = vpop.f32.mrf.mxu0
    %v546 = vadd.f32 %v422, %v545
    %v547 = vpop.f32.mrf.mxu0
    %548 = vmatprep.mubr.f32.mxu0 0.0
    %549 = vmatmul.mubr.f32.gmra.mxu0 %v467
    %v550 = vpop.f32.mrf.mxu0
    %v551 = vadd.f32 %v423, %v550
    %v552 = vpop.f32.mrf.mxu0
    %553 = vdwg.mxu0
    %v554 = vstv %s386
    %v555 = vmul.f32 %v554, %v389
    %v556 = vmul.f32 %v554, %v390
    %v557 = vmul.f32 %v554, %v391
    %v558 = vmul.f32 %v554, %v392
    %v559 = vadd.f32 %v536, %v555
    %v560 = vadd.f32 %v541, %v556
    %v561 = vadd.f32 %v546, %v557
    %v562 = vadd.f32 %v551, %v558
    %563 = vst [vmem:[#allocation10] sm:$0xff] %v559
    %564 = vst [vmem:[#allocation10 + $0x8] sm:$0xff] %v560
    %565 = vst [vmem:[#allocation10 + $0x10] sm:$0xff] %v561
    %566 = vst [vmem:[#allocation10 + $0x18] sm:$0xff] %v562
    %s567 = smul.f32 %s388, %s385
    %v568 = vld [vmem:[%s9] sm:$0x1]
    %v569 = vsub.f32 %v83, %v568
    %v570 = vstv %s567
    %v571 = vmul.f32 %v570, %v569
    %v572 = vadd.f32 %v384, %v571
    %v573 = vmul.f32 %v554, %v393
    %v574 = vadd.f32 %v572, %v573
    %575 = vst [vmem:[#allocation11] sm:$0x1] %v574
    %vm576 = vcmp.lt.s32.totalorder %v260, 10
    %v577 = vld [vmem:[#allocation6] sm:$0xff]
    %v578 = vld [vmem:[#allocation6 + $0x8] sm:$0xff]
    %v579 = vld [vmem:[#allocation6 + $0x10] sm:$0xff]
    %v580 = vld [vmem:[#allocation6 + $0x18] sm:$0xff]
    %v581 = vld [vmem:[#allocation6 + $0x20] sm:$0xff]
    %v582 = vld [vmem:[#allocation6 + $0x28] sm:$0xff]
    %v583 = vld [vmem:[#allocation6 + $0x30] sm:$0xff]
    %v584 = vld [vmem:[#allocation6 + $0x38] sm:$0xff]
    %v585 = vld [vmem:[#allocation6 + $0x40] sm:$0xff]
    %v586 = vld [vmem:[#allocation6 + $0x48] sm:$0xff]
    %v587 = vld [vmem:[#allocation6 + $0x50] sm:$0xff]
    %v588 = vld [vmem:[#allocation6 + $0x58] sm:$0xff]
    %v589 = vld [vmem:[#allocation6 + $0x60] sm:$0xff]
    %v590 = vld [vmem:[#allocation6 + $0x68] sm:$0xff]
    %v591 = vld [vmem:[#allocation6 + $0x70] sm:$0xff]
    %v592 = vld [vmem:[#allocation6 + $0x78] sm:$0xff]
    %v593 = vsub.f32 %v84, %v577
    %v594 = vsub.f32 %v85, %v578
    %v595 = vsub.f32 %v86, %v579
    %v596 = vsub.f32 %v87, %v580
    %v597 = vsub.f32 %v88, %v581
    %v598 = vsub.f32 %v89, %v582
    %v599 = vsub.f32 %v90, %v583
    %v600 = vsub.f32 %v91, %v584
    %v601 = vsub.f32 %v92, %v585
    %v602 = vsub.f32 %v93, %v586
    %v603 = vsub.f32 %v94, %v587
    %v604 = vsub.f32 %v95, %v588
    %v605 = vsub.f32 %v96, %v589
    %v606 = vsub.f32 %v97, %v590
    %v607 = vsub.f32 %v98, %v591
    %v608 = vsub.f32 %v99, %v592
    %v609 = vmul.f32 %v419, %v593
    %v610 = vmul.f32 %v419, %v594
    %v611 = vmul.f32 %v419, %v595
    %v612 = vmul.f32 %v419, %v596
    %v613 = vmul.f32 %v419, %v597
    %v614 = vmul.f32 %v419, %v598
    %v615 = vmul.f32 %v419, %v599
    %v616 = vmul.f32 %v419, %v600
    %v617 = vmul.f32 %v419, %v601
    %v618 = vmul.f32 %v419, %v602
    %v619 = vmul.f32 %v419, %v603
    %v620 = vmul.f32 %v419, %v604
    %v621 = vmul.f32 %v419, %v605
    %v622 = vmul.f32 %v419, %v606
    %v623 = vmul.f32 %v419, %v607
    %v624 = vmul.f32 %v419, %v608
    %625 = vxpose.xlu0.b32.start [1/16] %v181, 128
    %626 = vxpose.xlu0.b32.cont [2/16] 0.0, 128
    %627 = vxpose.xlu0.b32.cont [3/16] 0.0, 128
    %628 = vxpose.xlu0.b32.cont [4/16] 0.0, 128
    %629 = vxpose.xlu0.b32.cont [5/16] 0.0, 128
    %630 = vxpose.xlu0.b32.cont [6/16] 0.0, 128
    %631 = vxpose.xlu0.b32.cont [7/16] 0.0, 128
    %632 = vxpose.xlu0.b32.cont [8/16] 0.0, 128
    %633 = vxpose.xlu0.b32.cont [9/16] 0.0, 128
    %634 = vxpose.xlu0.b32.cont [10/16] 0.0, 128
    %635 = vxpose.xlu0.b32.cont [11/16] 0.0, 128
    %636 = vxpose.xlu0.b32.cont [12/16] 0.0, 128
    %637 = vxpose.xlu0.b32.cont [13/16] 0.0, 128
    %638 = vxpose.xlu0.b32.cont [14/16] 0.0, 128
    %639 = vxpose.xlu0.b32.cont [15/16] 0.0, 128
    %640 = vxpose.xlu0.b32.end [16/16] 0.0, 128
    %v641 = vpop.trf.xlu0
    %v642 = vpop.trf.xlu0
    %v643 = vpop.trf.xlu0
    %v644 = vpop.trf.xlu0
    %v645 = vpop.trf.xlu0
    %v646 = vpop.trf.xlu0
    %v647 = vpop.trf.xlu0
    %v648 = vpop.trf.xlu0
    %v649 = vpop.trf.xlu0
    %v650 = vpop.trf.xlu0
    %v651 = vpop.trf.xlu0
    %v652 = vpop.trf.xlu0
    %v653 = vpop.trf.xlu0
    %v654 = vpop.trf.xlu0
    %v655 = vpop.trf.xlu0
    %v656 = vpop.trf.xlu0
    %v658 = vsel %vm456, %v641, 0
    %v661 = vsel %vm456, %v642, 0
    %v664 = vsel %vm456, %v643, 0
    %v667 = vsel %vm456, %v644, 0
    %v670 = vsel %vm456, %v645, 0
    %v673 = vsel %vm456, %v646, 0
    %v676 = vsel %vm456, %v647, 0
    %v679 = vsel %vm456, %v648, 0
    %v682 = vsel %vm456, %v649, 0
    %v685 = vsel %vm456, %v650, 0
    %v688 = vsel %vm456, %v651, 0
    %v691 = vsel %vm456, %v652, 0
    %v694 = vsel %vm456, %v653, 0
    %v697 = vsel %vm456, %v654, 0
    %v700 = vsel %vm456, %v655, 0
    %v703 = vsel %vm456, %v656, 0
    %705 = vmatprep.subr.mxu0 0.0
    %706 = vmatpush1.msra.mxu0 0.0
    %707 = vmatprep.subr.mxu0 0.0
    %708 = vmatpush1.msra.mxu0 0.0
    %709 = vmatprep.subr.mxu0 0.0
    %710 = vmatpush1.msra.mxu0 0.0
    %711 = vmatprep.subr.mxu0 0.0
    %712 = vmatpush1.msra.mxu0 0.0
    %713 = vmatprep.subr.mxu0 0.0
    %714 = vmatpush1.msra.mxu0 0.0
    %715 = vmatprep.subr.mxu0 0.0
    %716 = vmatpush1.msra.mxu0 0.0
    %717 = vmatprep.subr.mxu0 0.0
    %718 = vmatpush1.msra.mxu0 0.0
    %719 = vmatprep.subr.mxu0 0.0
    %720 = vmatpush1.msra.mxu0 0.0
    %721 = vmatprep.subr.mxu0 0.0
    %722 = vmatpush1.msra.mxu0 0.0
    %723 = vmatprep.subr.mxu0 0.0
    %724 = vmatpush1.msra.mxu0 0.0
    %725 = vmatprep.subr.mxu0 0.0
    %726 = vmatpush1.msra.mxu0 0.0
    %727 = vmatprep.subr.mxu0 0.0
    %728 = vmatpush1.msra.mxu0 0.0
    %729 = vmatprep.subr.mxu0 0.0
    %730 = vmatpush1.msra.mxu0 0.0
    %731 = vmatprep.subr.mxu0 0.0
    %732 = vmatpush1.msra.mxu0 0.0
    %733 = vmatprep.subr.mxu0 0.0
    %734 = vmatpush1.msra.mxu0 0.0
    %735 = vmatprep.subr.mxu0 0.0
    %736 = vmatpush1.msra.mxu0 %v300
    %737 = vmatprep.subr.mxu0 0.0
    %738 = vmatpush2.msra.mxu0 0.0
    %739 = vmatprep.subr.mxu0 0.0
    %740 = vmatpush2.msra.mxu0 0.0
    %741 = vmatprep.subr.mxu0 0.0
    %742 = vmatpush2.msra.mxu0 0.0
    %743 = vmatprep.subr.mxu0 0.0
    %744 = vmatpush2.msra.mxu0 0.0
    %745 = vmatprep.subr.mxu0 0.0
    %746 = vmatpush2.msra.mxu0 0.0
    %747 = vmatprep.subr.mxu0 0.0
    %748 = vmatpush2.msra.mxu0 0.0
    %749 = vmatprep.subr.mxu0 0.0
    %750 = vmatpush2.msra.mxu0 0.0
    %751 = vmatprep.subr.mxu0 0.0
    %752 = vmatpush2.msra.mxu0 0.0
    %753 = vmatprep.subr.mxu0 0.0
    %754 = vmatpush2.msra.mxu0 0.0
    %755 = vmatprep.subr.mxu0 0.0
    %756 = vmatpush2.msra.mxu0 0.0
    %757 = vmatprep.subr.mxu0 0.0
    %758 = vmatpush2.msra.mxu0 0.0
    %759 = vmatprep.subr.mxu0 0.0
    %760 = vmatpush2.msra.mxu0 0.0
    %761 = vmatprep.subr.mxu0 0.0
    %762 = vmatpush2.msra.mxu0 0.0
    %763 = vmatprep.subr.mxu0 0.0
    %764 = vmatpush2.msra.mxu0 0.0
    %765 = vmatprep.subr.mxu0 0.0
    %766 = vmatpush2.msra.mxu0 0.0
    %767 = vmatprep.subr.mxu0 0.0
    %768 = vmatpush2.msra.mxu0 0.0
    %769 = vmatprep.mubr.f32.mxu0 0.0
    %770 = vmatmul.mubr.f32.gmra.mxu0 %v658
    %v771 = vpop.f32.mrf.mxu0
    %v772 = vadd.f32 %v609, %v771
    %v773 = vpop.f32.mrf.mxu0
    %774 = vmatprep.mubr.f32.mxu0 0.0
    %775 = vmatmul.mubr.f32.gmra.mxu0 %v661
    %v776 = vpop.f32.mrf.mxu0
    %v777 = vadd.f32 %v610, %v776
    %v778 = vpop.f32.mrf.mxu0
    %779 = vmatprep.mubr.f32.mxu0 0.0
    %780 = vmatmul.mubr.f32.gmra.mxu0 %v664
    %v781 = vpop.f32.mrf.mxu0
    %v782 = vadd.f32 %v611, %v781
    %v783 = vpop.f32.mrf.mxu0
    %784 = vmatprep.mubr.f32.mxu0 0.0
    %785 = vmatmul.mubr.f32.gmra.mxu0 %v667
    %v786 = vpop.f32.mrf.mxu0
    %v787 = vadd.f32 %v612, %v786
    %v788 = vpop.f32.mrf.mxu0
    %789 = vmatprep.mubr.f32.mxu0 0.0
    %790 = vmatmul.mubr.f32.gmra.mxu0 %v670
    %v791 = vpop.f32.mrf.mxu0
    %v792 = vadd.f32 %v613, %v791
    %v793 = vpop.f32.mrf.mxu0
    %794 = vmatprep.mubr.f32.mxu0 0.0
    %795 = vmatmul.mubr.f32.gmra.mxu0 %v673
    %v796 = vpop.f32.mrf.mxu0
    %v797 = vadd.f32 %v614, %v796
    %v798 = vpop.f32.mrf.mxu0
    %799 = vmatprep.mubr.f32.mxu0 0.0
    %800 = vmatmul.mubr.f32.gmra.mxu0 %v676
    %v801 = vpop.f32.mrf.mxu0
    %v802 = vadd.f32 %v615, %v801
    %v803 = vpop.f32.mrf.mxu0
    %804 = vmatprep.mubr.f32.mxu0 0.0
    %805 = vmatmul.mubr.f32.gmra.mxu0 %v679
    %v806 = vpop.f32.mrf.mxu0
    %v807 = vadd.f32 %v616, %v806
    %v808 = vpop.f32.mrf.mxu0
    %809 = vmatprep.mubr.f32.mxu0 0.0
    %810 = vmatmul.mubr.f32.gmra.mxu0 %v682
    %v811 = vpop.f32.mrf.mxu0
    %v812 = vadd.f32 %v617, %v811
    %v813 = vpop.f32.mrf.mxu0
    %814 = vmatprep.mubr.f32.mxu0 0.0
    %815 = vmatmul.mubr.f32.gmra.mxu0 %v685
    %v816 = vpop.f32.mrf.mxu0
    %v817 = vadd.f32 %v618, %v816
    %v818 = vpop.f32.mrf.mxu0
    %819 = vmatprep.mubr.f32.mxu0 0.0
    %820 = vmatmul.mubr.f32.gmra.mxu0 %v688
    %v821 = vpop.f32.mrf.mxu0
    %v822 = vadd.f32 %v619, %v821
    %v823 = vpop.f32.mrf.mxu0
    %824 = vmatprep.mubr.f32.mxu0 0.0
    %825 = vmatmul.mubr.f32.gmra.mxu0 %v691
    %v826 = vpop.f32.mrf.mxu0
    %v827 = vadd.f32 %v620, %v826
    %v828 = vpop.f32.mrf.mxu0
    %829 = vmatprep.mubr.f32.mxu0 0.0
    %830 = vmatmul.mubr.f32.gmra.mxu0 %v694
    %v831 = vpop.f32.mrf.mxu0
    %v832 = vadd.f32 %v621, %v831
    %v833 = vpop.f32.mrf.mxu0
    %834 = vmatprep.mubr.f32.mxu0 0.0
    %835 = vmatmul.mubr.f32.gmra.mxu0 %v697
    %v836 = vpop.f32.mrf.mxu0
    %v837 = vadd.f32 %v622, %v836
    %v838 = vpop.f32.mrf.mxu0
    %839 = vmatprep.mubr.f32.mxu0 0.0
    %840 = vmatmul.mubr.f32.gmra.mxu0 %v700
    %v841 = vpop.f32.mrf.mxu0
    %v842 = vadd.f32 %v623, %v841
    %v843 = vpop.f32.mrf.mxu0
    %844 = vmatprep.mubr.f32.mxu0 0.0
    %845 = vmatmul.mubr.f32.gmra.mxu0 %v703
    %v846 = vpop.f32.mrf.mxu0
    %v847 = vadd.f32 %v624, %v846
    %v848 = vpop.f32.mrf.mxu0
    %849 = vdwg.mxu0
    %v850 = vstv %s387
    %v851 = vmul.f32 %v850, %v394
    %v852 = vmul.f32 %v850, %v395
    %v853 = vmul.f32 %v850, %v396
    %v854 = vmul.f32 %v850, %v397
    %v855 = vmul.f32 %v850, %v398
    %v856 = vmul.f32 %v850, %v399
    %v857 = vmul.f32 %v850, %v400
    %v858 = vmul.f32 %v850, %v401
    %v859 = vmul.f32 %v850, %v402
    %v860 = vmul.f32 %v850, %v403
    %v861 = vmul.f32 %v850, %v404
    %v862 = vmul.f32 %v850, %v405
    %v863 = vmul.f32 %v850, %v406
    %v864 = vmul.f32 %v850, %v407
    %v865 = vmul.f32 %v850, %v408
    %v866 = vmul.f32 %v850, %v409
    %v867 = vadd.f32 %v772, %v851
    %v868 = vadd.f32 %v777, %v852
    %v869 = vadd.f32 %v782, %v853
    %v870 = vadd.f32 %v787, %v854
    %v871 = vadd.f32 %v792, %v855
    %v872 = vadd.f32 %v797, %v856
    %v873 = vadd.f32 %v802, %v857
    %v874 = vadd.f32 %v807, %v858
    %v875 = vadd.f32 %v812, %v859
    %v876 = vadd.f32 %v817, %v860
    %v877 = vadd.f32 %v822, %v861
    %v878 = vadd.f32 %v827, %v862
    %v879 = vadd.f32 %v832, %v863
    %v880 = vadd.f32 %v837, %v864
    %v881 = vadd.f32 %v842, %v865
    %v882 = vadd.f32 %v847, %v866
    %v883 = vsel %vm576, %v867, 0.0
    %v884 = vsel %vm576, %v868, 0.0
    %v885 = vsel %vm576, %v869, 0.0
    %v886 = vsel %vm576, %v870, 0.0
    %v887 = vsel %vm576, %v871, 0.0
    %v888 = vsel %vm576, %v872, 0.0
    %v889 = vsel %vm576, %v873, 0.0
    %v890 = vsel %vm576, %v874, 0.0
    %v891 = vsel %vm576, %v875, 0.0
    %v892 = vsel %vm576, %v876, 0.0
    %v893 = vsel %vm576, %v877, 0.0
    %v894 = vsel %vm576, %v878, 0.0
    %v895 = vsel %vm576, %v879, 0.0
    %v896 = vsel %vm576, %v880, 0.0
    %v897 = vsel %vm576, %v881, 0.0
    %v898 = vsel %vm576, %v882, 0.0
    %899 = vst [vmem:[#allocation13] sm:$0xff] %v883
    %900 = vst [vmem:[#allocation13 + $0x8] sm:$0xff] %v884
    %901 = vst [vmem:[#allocation13 + $0x10] sm:$0xff] %v885
    %902 = vst [vmem:[#allocation13 + $0x18] sm:$0xff] %v886
    %903 = vst [vmem:[#allocation13 + $0x20] sm:$0xff] %v887
    %904 = vst [vmem:[#allocation13 + $0x28] sm:$0xff] %v888
    %905 = vst [vmem:[#allocation13 + $0x30] sm:$0xff] %v889
    %906 = vst [vmem:[#allocation13 + $0x38] sm:$0xff] %v890
    %907 = vst [vmem:[#allocation13 + $0x40] sm:$0xff] %v891
    %908 = vst [vmem:[#allocation13 + $0x48] sm:$0xff] %v892
    %909 = vst [vmem:[#allocation13 + $0x50] sm:$0xff] %v893
    %910 = vst [vmem:[#allocation13 + $0x58] sm:$0xff] %v894
    %911 = vst [vmem:[#allocation13 + $0x60] sm:$0xff] %v895
    %912 = vst [vmem:[#allocation13 + $0x68] sm:$0xff] %v896
    %913 = vst [vmem:[#allocation13 + $0x70] sm:$0xff] %v897
    %914 = vst [vmem:[#allocation13 + $0x78] sm:$0xff] %v898
    %v915 = vld [vmem:[%s11] sm:$0x1]
    %v916 = vsub.f32 %v100, %v915
    %v917 = vmul.f32 %v570, %v916
    %v918 = vadd.f32 %v306, %v917
    %v919 = vmul.f32 %v850, %v410
    %v920 = vadd.f32 %v918, %v919
    %v921 = vsel %vm576, %v920, 0.0
    %922 = vst [vmem:[#allocation14] sm:$0x1] %v921
    // Predicated region
    $region58: #{_sgld_step.1} parent=1 // pred_check
      _
    $region59: #{_sgld_step.1} parent=1 // pred_check_branch
      %924 = sbr.rel (0) target = $region61
    $region60: #{_sgld_step.1} parent=1 // pred_region
      %s926 = ssub.s32 16, 16
      %927 = vsyncadd [#allocation4], %s926
      %s929 = sshll.u32 [#allocation7], 4
      %s930 = int_to_ptr.vmem [resolvable:$true] %s929
      %932 = dma.vmem_to_hbm [thread:$0]  %s930, 16, %s12, [#allocation4]
    $region61: #{_sgld_step.1} parent=1 // pred_fallthru
      _
    // Predicated region
    $region62: #{_sgld_step.1} parent=1 // pred_check
      _
    $region63: #{_sgld_step.1} parent=1 // pred_check_branch
      %934 = sbr.rel (0) target = $region65
    $region64: #{_sgld_step.1} parent=1 // pred_region
      %s936 = ssub.s32 128, 128
      %937 = vsyncadd [#allocation9], %s936
      %s939 = sshll.u32 [#allocation8], 4
      %s940 = int_to_ptr.vmem [resolvable:$true] %s939
      %942 = dma.vmem_to_hbm [thread:$0]  %s940, 128, %s13, [#allocation9]
    $region65: #{_sgld_step.1} parent=1 // pred_fallthru
      _
    // Predicated region
    $region66: #{_sgld_step.1} parent=1 // pred_check
      _
    $region67: #{_sgld_step.1} parent=1 // pred_check_branch
      %944 = sbr.rel (0) target = $region69
    $region68: #{_sgld_step.1} parent=1 // pred_region
      %s946 = ssub.s32 512, 512
      %947 = vsyncadd [#allocation9], %s946
      %s948 = sshll.u32 [#allocation10], 4
      %s949 = int_to_ptr.vmem [resolvable:$true] %s948
      %954 = dma.vmem_to_hbm [thread:$0]  %s949, 512, %s14, [#allocation9], 128, 128, 8
    $region69: #{_sgld_step.1} parent=1 // pred_fallthru
      _
    // Predicated region
    $region70: #{_sgld_step.1} parent=1 // pred_check
      _
    $region71: #{_sgld_step.1} parent=1 // pred_check_branch
      %956 = sbr.rel (0) target = $region73
    $region72: #{_sgld_step.1} parent=1 // pred_region
      %s958 = ssub.s32 16, 16
      %959 = vsyncadd [#allocation12], %s958
      %s961 = sshll.u32 [#allocation11], 4
      %s962 = int_to_ptr.vmem [resolvable:$true] %s961
      %964 = dma.vmem_to_hbm [thread:$0]  %s962, 16, %s15, [#allocation12]
    $region73: #{_sgld_step.1} parent=1 // pred_fallthru
      _
    // Predicated region
    $region74: #{_sgld_step.1} parent=1 // pred_check
      _
    $region75: #{_sgld_step.1} parent=1 // pred_check_branch
      %966 = sbr.rel (0) target = $region77
    $region76: #{_sgld_step.1} parent=1 // pred_region
      %s968 = ssub.s32 2048, 2048
      %969 = vsyncadd [#allocation12], %s968
      %s970 = sshll.u32 [#allocation13], 4
      %s971 = int_to_ptr.vmem [resolvable:$true] %s970
      %976 = dma.vmem_to_hbm [thread:$0]  %s971, 2048, %s16, [#allocation12], 128, 128, 8
    $region77: #{_sgld_step.1} parent=1 // pred_fallthru
      _
    // Predicated region
    $region78: #{_sgld_step.1} parent=1 // pred_check
      _
    $region79: #{_sgld_step.1} parent=1 // pred_check_branch
      %978 = sbr.rel (0) target = $region81
    $region80: #{_sgld_step.1} parent=1 // pred_region
      %s980 = ssub.s32 16, 16
      %981 = vsyncadd [#allocation15], %s980
      %s983 = sshll.u32 [#allocation14], 4
      %s984 = int_to_ptr.vmem [resolvable:$true] %s983
      %986 = dma.vmem_to_hbm [thread:$0]  %s984, 16, %s17, [#allocation15]
    $region81: #{_sgld_step.1} parent=1 // pred_fallthru
      _
    // Predicated region
    $region82: #{_sgld_step.1} parent=1 // pred_check
      _
    $region83: #{_sgld_step.1} parent=1 // pred_check_branch
      %988 = sbr.rel (0) target = $region85
    $region84: #{_sgld_step.1} parent=1 // pred_region
      %989 = dma.done [#allocation4], 16
    $region85: #{_sgld_step.1} parent=1 // pred_fallthru
      _
    // Predicated region
    $region86: #{_sgld_step.1} parent=1 // pred_check
      _
    $region87: #{_sgld_step.1} parent=1 // pred_check_branch
      %991 = sbr.rel (0) target = $region89
    $region88: #{_sgld_step.1} parent=1 // pred_region
      %992 = dma.done [#allocation9], 128
    $region89: #{_sgld_step.1} parent=1 // pred_fallthru
      _
    // Predicated region
    $region90: #{_sgld_step.1} parent=1 // pred_check
      _
    $region91: #{_sgld_step.1} parent=1 // pred_check_branch
      %994 = sbr.rel (0) target = $region93
    $region92: #{_sgld_step.1} parent=1 // pred_region
      %995 = dma.done [#allocation9], 512
    $region93: #{_sgld_step.1} parent=1 // pred_fallthru
      _
    // Predicated region
    $region94: #{_sgld_step.1} parent=1 // pred_check
      _
    $region95: #{_sgld_step.1} parent=1 // pred_check_branch
      %997 = sbr.rel (0) target = $region97
    $region96: #{_sgld_step.1} parent=1 // pred_region
      %998 = dma.done [#allocation12], 16
    $region97: #{_sgld_step.1} parent=1 // pred_fallthru
      _
    // Predicated region
    $region98: #{_sgld_step.1} parent=1 // pred_check
      _
    $region99: #{_sgld_step.1} parent=1 // pred_check_branch
      %1000 = sbr.rel (0) target = $region101
    $region100: #{_sgld_step.1} parent=1 // pred_region
      %1001 = dma.done [#allocation12], 2048
    $region101: #{_sgld_step.1} parent=1 // pred_fallthru
      _
    // Predicated region
    $region102: #{_sgld_step.1} parent=1 // pred_check
      _
    $region103: #{_sgld_step.1} parent=1 // pred_check_branch
      %1003 = sbr.rel (0) target = $region105
    $region104: #{_sgld_step.1} parent=1 // pred_region
      %1004 = dma.done [#allocation15], 16
    $region105: #{_sgld_step.1} parent=1 // pred_fallthru
      _
    %1005 = vsyncpa [#allocation3], 1
    %1006 = vsyncpa [#allocation4], 1
    %1007 = vsyncpa [#allocation9], 1
    %1008 = vsyncpa [#allocation12], 1
    %1009 = vsyncpa [#allocation15], 1
    %1010 = vsyncpa [#allocation5], 1

</llo_original>
